<compile_context>
chip_gen: v7x
topology: tpu7x:2x2x1
jax: 0.10.0
libtpu: 0.0.40
codegen_flags: <defaults>
</compile_context>

<pallas_src>
import functools

import jax
import jax.numpy as jnp
from jax.experimental import pallas as pl
from jax.experimental.pallas import tpu as pltpu

IN_DIM = 784
HID_DIM = 256
OUT_DIM = 10
OUT_PAD = 128          # lane-dense padded output width (multiple of 128 lanes)


def _mlp_kernel(x_ref, w1_ref, b1_ref, w2_ref, b2_ref, o_ref):
    # x_ref : (bm, 784)  bf16     w1_ref: (784, 256) bf16    b1_ref: (1, 256) f32
    # w2_ref: (256, 128) bf16     b2_ref: (1, 128)  f32      o_ref : (bm, 128) bf16
    # Layer 1: bf16 operands on the MXU, f32 accumulation; bias+ReLU in f32 (VPU).
    h = jnp.dot(x_ref[...], w1_ref[...], preferred_element_type=jnp.float32)
    h = jnp.maximum(h + b1_ref[...], 0.0)
    # Layer 2: lane-dense N=128 (columns 10..127 of W2/b2 are zero).
    y = jnp.dot(h.astype(jnp.bfloat16), w2_ref[...],
                preferred_element_type=jnp.float32)
    o_ref[...] = (y + b2_ref[...]).astype(o_ref.dtype)


def prepare_params(w1, b1, w2, b2):
    """One-time weight prep (do OUTSIDE the per-step hot path).

    - transpose torch [out, in] weights to row-major (in, out),
    - cast weights to bf16 for the MXU,
    - zero-pad the final N from 10 -> 128 so output stores are lane-dense.
    Zero padding is numerically exact; the wrapper slices back to 10 columns.
    """
    w1_t = w1.T.astype(jnp.bfloat16)                                   # (784, 256)
    w2_t = jnp.zeros((HID_DIM, OUT_PAD), jnp.bfloat16)
    w2_t = w2_t.at[:, :OUT_DIM].set(w2.T.astype(jnp.bfloat16))         # (256, 128)
    b1_2d = b1.reshape(1, HID_DIM).astype(jnp.float32)                 # (1, 256)
    b2_2d = jnp.zeros((1, OUT_PAD), jnp.float32)
    b2_2d = b2_2d.at[:, :OUT_DIM].set(b2.reshape(1, OUT_DIM))          # (1, 128)
    return w1_t, b1_2d, w2_t, b2_2d


@functools.partial(jax.jit, static_argnames=("block_rows",))
def simple_nn_forward(x, w1_t, b1_2d, w2_t, b2_2d, *, block_rows=1024):
    """Forward pass: relu(flatten(x) @ W1^T + b1) @ W2^T + b2  ->  (B, 10) f32.

    x: (B, 1, 28, 28) or (B, 784); ideally already bf16 (producer-side cast).
    Params come from prepare_params().
    """
    if x.ndim > 2:
        x = x.reshape(x.shape[0], -1)        # nn.Flatten (row-major, same as torch)
    if x.dtype != jnp.bfloat16:
        # Fallback for f32 callers: allow_input_fusion lets XLA fuse this
        # flatten/cast into the pallas_call input instead of a separate HBM pass.
        x = x.astype(jnp.bfloat16)
    B = x.shape[0]

    # Batch tile: ~B/2 rounded up to 8 sublanes (>=2 grid steps when B > 8 so
    # both TensorCores get work on v7x), capped at block_rows (default 1024,
    # ~4.5 MiB total VMEM incl. double buffers -> safe on v5e/v6e/v7x).
    bm = min(block_rows, max(8, pl.cdiv(pl.cdiv(B, 2), 8) * 8))
    grid = (pl.cdiv(B, bm),)                 # partial last tile handled by masking

    flops = 2 * B * (IN_DIM * HID_DIM + HID_DIM * OUT_PAD)
    bytes_accessed = (B * IN_DIM * 2                 # X (bf16)
                      + IN_DIM * HID_DIM * 2         # W1 (bf16)
                      + HID_DIM * 4                  # b1 (f32)
                      + HID_DIM * OUT_PAD * 2        # W2 (bf16)
                      + OUT_PAD * 4                  # b2 (f32)
                      + B * OUT_PAD * 2)             # out slab (bf16)

    out = pl.pallas_call(
        _mlp_kernel,
        out_shape=jax.ShapeDtypeStruct((B, OUT_PAD), jnp.bfloat16),
        grid_spec=pltpu.PrefetchScalarGridSpec(
            num_scalar_prefetch=0,
            grid=grid,
            in_specs=[
                pl.BlockSpec((bm, IN_DIM), lambda i: (i, 0)),       # X tile (pipelined)
                pl.BlockSpec((IN_DIM, HID_DIM), lambda i: (0, 0)),  # W1: VMEM-resident
                pl.BlockSpec((1, HID_DIM), lambda i: (0, 0)),       # b1: VMEM-resident
                pl.BlockSpec((HID_DIM, OUT_PAD), lambda i: (0, 0)), # W2: VMEM-resident
                pl.BlockSpec((1, OUT_PAD), lambda i: (0, 0)),       # b2: VMEM-resident
            ],
            out_specs=pl.BlockSpec((bm, OUT_PAD), lambda i: (i, 0)),
        ),
        compiler_params=pltpu.CompilerParams(
            dimension_semantics=("parallel",),                       # megacore on v7x
            allow_input_fusion=[True, False, False, False, False],   # fuse X cast/flatten
        ),
        cost_estimate=pl.CostEstimate(
            flops=flops, transcendentals=0, bytes_accessed=bytes_accessed),
    )(x, w1_t, b1_2d, w2_t, b2_2d)

    # Column slice back to the 10 real logits; the f32 up-cast fuses into this
    # tiny copy (output row count already equals B -- no batch padding to drop).
    return out[:, :OUT_DIM].astype(jnp.float32)


def init_params(key):
    """Deterministic init matching torch: normal(std=0.01) weights, zero biases."""
    k1, k2 = jax.random.split(key)
    w1 = 0.01 * jax.random.normal(k1, (HID_DIM, IN_DIM), dtype=jnp.float32)
    b1 = jnp.zeros((HID_DIM,), dtype=jnp.float32)
    w2 = 0.01 * jax.random.normal(k2, (OUT_DIM, HID_DIM), dtype=jnp.float32)
    b2 = jnp.zeros((OUT_DIM,), dtype=jnp.float32)
    return w1, b1, w2, b2


if __name__ == "__main__":
    key = jax.random.PRNGKey(0)
    k_x, k_p = jax.random.split(key)

    B = 16
    x_f32 = jax.random.normal(k_x, (B, 1, 28, 28), dtype=jnp.float32)  # NCHW MNIST-like
    # Producer-side bf16 (per perf review): kernel input is already half-width,
    # no wrapper-side HBM cast pass needed.
    x = x_f32.astype(jnp.bfloat16)

    w1, b1, w2, b2 = init_params(k_p)
    # One-time weight prep (transpose + bf16 cast + N padding), outside hot path.
    params = prepare_params(w1, b1, w2, b2)

    # block_rows=8 with B=16 exercises the tiled / pipelined path (grid=(2,)).
    out = simple_nn_forward(x, *params, block_rows=8)
    out = jax.block_until_ready(out)

    # Reference in plain f32 JAX (same math as the torch module).  The kernel
    # uses bf16 MXU operands / bf16 output slab with f32 accumulation, so allow
    # bf16-level error.
    x_flat = x_f32.reshape(B, -1)
    ref = jnp.maximum(x_flat @ w1.T + b1, 0.0) @ w2.T + b2
    assert out.shape == (B, OUT_DIM)
    assert out.dtype == jnp.float32
    max_err = float(jnp.max(jnp.abs(out - ref)))
    assert jnp.allclose(out, ref, atol=1e-2, rtol=5e-2), max_err

    print("KERNEL_OK")
</pallas_src>

<mosaic_0001>
module attributes {stable_mosaic.version = 11 : i64} {
  func.func @_mlp_kernel(%arg0: i32, %arg1: memref<8x784xbf16, #tpu.memory_space<vmem>>, %arg2: memref<784x256xbf16, #tpu.memory_space<vmem>>, %arg3: memref<1x256xf32, #tpu.memory_space<vmem>>, %arg4: memref<256x128xbf16, #tpu.memory_space<vmem>>, %arg5: memref<1x128xf32, #tpu.memory_space<vmem>>, %arg6: memref<8x128xbf16, #tpu.memory_space<vmem>>) attributes {dimension_semantics = [#tpu.dimension_semantics<parallel>], iteration_bounds = array<i64: 2>, scalar_prefetch = 0 : i64, scratch_operands = 0 : i64, tpu.core_type = #tpu.core_type<tc>, window_params = [{transform_indices = @transform_0, window_bounds = array<i64: 8, 784>}, {pipeline_mode = #tpu.pipeline_mode<synchronous>, transform_indices = @transform_1, window_bounds = array<i64: 784, 256>}, {pipeline_mode = #tpu.pipeline_mode<synchronous>, transform_indices = @transform_2, window_bounds = array<i64: 1, 256>}, {pipeline_mode = #tpu.pipeline_mode<synchronous>, transform_indices = @transform_3, window_bounds = array<i64: 256, 128>}, {pipeline_mode = #tpu.pipeline_mode<synchronous>, transform_indices = @transform_4, window_bounds = array<i64: 1, 128>}, {transform_indices = @transform_5, window_bounds = array<i64: 8, 128>}]} {
    %c0 = arith.constant 0 : index
    %c0_0 = arith.constant 0 : index
    %0 = vector.load %arg1[%c0, %c0_0] : memref<8x784xbf16, #tpu.memory_space<vmem>>, vector<8x784xbf16>
    %c0_1 = arith.constant 0 : index
    %c0_2 = arith.constant 0 : index
    %1 = vector.load %arg2[%c0_1, %c0_2] : memref<784x256xbf16, #tpu.memory_space<vmem>>, vector<784x256xbf16>
    %cst = arith.constant dense<0.000000e+00> : vector<8x256xf32>
    %2 = tpu.matmul %0, %1, %cst {dimension_numbers = #tpu.dot_dimension_numbers<[1], [0], [0], [1], [0, 0, 1, 1], [], []>} : vector<8x784xbf16>, vector<784x256xbf16>, vector<8x256xf32> -> vector<8x256xf32>
    %c0_3 = arith.constant 0 : index
    %c0_4 = arith.constant 0 : index
    %3 = vector.load %arg3[%c0_3, %c0_4] : memref<1x256xf32, #tpu.memory_space<vmem>>, vector<1x256xf32>
    %4 = vector.broadcast %3 : vector<1x256xf32> to vector<8x256xf32>
    %5 = arith.addf %2, %4 : vector<8x256xf32>
    %cst_5 = arith.constant 0.000000e+00 : f32
    %6 = vector.broadcast %cst_5 : f32 to vector<8x256xf32>
    %7 = arith.maximumf %5, %6 : vector<8x256xf32>
    %8 = arith.truncf %7 : vector<8x256xf32> to vector<8x256xbf16>
    %c0_6 = arith.constant 0 : index
    %c0_7 = arith.constant 0 : index
    %9 = vector.load %arg4[%c0_6, %c0_7] : memref<256x128xbf16, #tpu.memory_space<vmem>>, vector<256x128xbf16>
    %cst_8 = arith.constant dense<0.000000e+00> : vector<8x128xf32>
    %10 = tpu.matmul %8, %9, %cst_8 {dimension_numbers = #tpu.dot_dimension_numbers<[1], [0], [0], [1], [0, 0, 1, 1], [], []>} : vector<8x256xbf16>, vector<256x128xbf16>, vector<8x128xf32> -> vector<8x128xf32>
    %c0_9 = arith.constant 0 : index
    %c0_10 = arith.constant 0 : index
    %11 = vector.load %arg5[%c0_9, %c0_10] : memref<1x128xf32, #tpu.memory_space<vmem>>, vector<1x128xf32>
    %12 = vector.broadcast %11 : vector<1x128xf32> to vector<8x128xf32>
    %13 = arith.addf %10, %12 : vector<8x128xf32>
    %14 = arith.truncf %13 : vector<8x128xf32> to vector<8x128xbf16>
    %c0_11 = arith.constant 0 : index
    %c0_12 = arith.constant 0 : index
    %15 = vector.load %arg6[%c0_11, %c0_12] : memref<8x128xbf16, #tpu.memory_space<vmem>>, vector<8x128xbf16>
    tpu.vector_store %arg6[%c0_11, %c0_12], %14 {strides = array<i32>} : memref<8x128xbf16, #tpu.memory_space<vmem>>, vector<8x128xbf16>,
    return
  }
  func.func @transform_0(%arg0: i32) -> (i32, i32) {
    %c0_i32 = arith.constant 0 : i32
    %c0_i32_0 = arith.constant 0 : i32
    return %arg0, %c0_i32 : i32, i32
  }
  func.func @transform_1(%arg0: i32) -> (i32, i32) {
    %c0_i32 = arith.constant 0 : i32
    %c0_i32_0 = arith.constant 0 : i32
    %c0_i32_1 = arith.constant 0 : i32
    return %c0_i32, %c0_i32_0 : i32, i32
  }
  func.func @transform_2(%arg0: i32) -> (i32, i32) {
    %c0_i32 = arith.constant 0 : i32
    %c0_i32_0 = arith.constant 0 : i32
    %c0_i32_1 = arith.constant 0 : i32
    return %c0_i32, %c0_i32_0 : i32, i32
  }
  func.func @transform_3(%arg0: i32) -> (i32, i32) {
    %c0_i32 = arith.constant 0 : i32
    %c0_i32_0 = arith.constant 0 : i32
    %c0_i32_1 = arith.constant 0 : i32
    return %c0_i32, %c0_i32_0 : i32, i32
  }
  func.func @transform_4(%arg0: i32) -> (i32, i32) {
    %c0_i32 = arith.constant 0 : i32
    %c0_i32_0 = arith.constant 0 : i32
    %c0_i32_1 = arith.constant 0 : i32
    return %c0_i32, %c0_i32_0 : i32, i32
  }
  func.func @transform_5(%arg0: i32) -> (i32, i32) {
    %c0_i32 = arith.constant 0 : i32
    %c0_i32_0 = arith.constant 0 : i32
    return %arg0, %c0_i32 : i32, i32
  }
}

</mosaic_0001>

<llo_original>
// kernel: simple_nn_forward.1
$region0: #{simple_nn_forward.1}
  #allocation0 [shape = 'u32[]', space=smem, size = 0x4, offset = 0x4, fixed_abs, tag = 'smem constant byte address 0x4 - core index']
  #allocation1 [shape = 'u32[144,128]{1,0:T(1,128)}', space=vmem, size = 0x12000, scoped, tag = 'internal scratch']
  %s0 = inlined_call_operand.vmem [shape: bf16[16,784], index: 0, kind: input, shape index: {}]
  %s1 = inlined_call_operand.vmem [shape: bf16[784,256], index: 1, kind: input, shape index: {}]
  %s2 = inlined_call_operand.vmem [shape: f32[1,256], index: 2, kind: input, shape index: {}]
  %s3 = inlined_call_operand.hbm [shape: bf16[256,128], index: 3, kind: input, shape index: {}]
  %s4 = inlined_call_operand.vmem [shape: f32[1,128], index: 4, kind: input, shape index: {}]
  %s5 = inlined_call_operand.vmem [shape: bf16[16,128], index: 5, kind: output, shape index: {}]
  %s6 = sld [smem:[#allocation0]]
  $region57: #{simple_nn_forward.1} parent=0
    _
  %s8 = ssub.s32 1, %s6
  %s9 = scalar_select 0, %s8, %s6
  $region1: #{simple_nn_forward.1} parent=0
    #allocation2 [shape = 'u8[65536]{0}', space=vmem, size = 0x10000, scoped, tag = 'input window, operand 3, single buffered']
    #allocation3 [shape = 's32[2]{0}', space=sflag, size = 0x8, scoped, tag = 'scoped memory for simple_nn_forward.1']
    %10 = vsyncpa [#allocation3], 0
    loop: start=0, step=1, limit=4
    $region2: #{simple_nn_forward.1} parent=1 // loop_pre_header
      _
    $region3: #{simple_nn_forward.1} parent=1 // loop_header
      %s12 = sphi 0, %s16
      %p13 = scmp.ge.s32.totalorder %s12, 4
      %s22 = sphi 0, %s24
      %s25 = sphi 0, %s22
      %s26 = sphi 0, %s25
      %s42 = sphi 0, %s26
      %s46 = sphi 0, %s46
      %s48 = sphi 0, %s46
      %s49 = sphi 0, %s48
      %s63 = sphi 0, %s49
      %s67 = sphi 0, %s67
      %s69 = sphi 0, %s67
      %s70 = sphi 0, %s69
      %s84 = sphi 0, %s70
      %s88 = sphi 0, %s88
      %s90 = sphi 0, %s88
      %s91 = sphi 0, %s90
      %s105 = sphi 0, %s91
      %s109 = sphi 0, %s109
      %s111 = sphi 0, %s109
      %s112 = sphi 0, %s111
      %s126 = sphi 0, %s112
      %s132 = sphi 0, %s134
      %s135 = sphi 0, %s132
      %s136 = sphi 0, %s135
      %s152 = sphi 0, %s136
    $region4: #{simple_nn_forward.1} parent=1 // loop_header_branch
      %15 = sbr.rel (%p13) target = $region8
    $region5: #{simple_nn_forward.1} parent=1 // loop_body
      %s17 = ssub.s32 %s12, 1
      %s18 = ssub.s32 %s12, 2
      %s19 = sadd.s32 %s12, 1
      %s20 = ssub.s32 %s12, %s19
      %p21 = scmp.eq.s32.totalorder %s20, 0
      %s23 = sadd.s32 %s22, 1
      %s24 = scalar_select %p21, %s22, %s23
      %p27 = pneg %p21
      %p28 = scmp.eq.s32.totalorder %s12, 1
      %p29 = por %p27, %p28
      %p30 = scmp.ne.s32.totalorder %s22, %s25
      %p31 = scmp.eq.s32.totalorder %s12, 0
      %p32 = por %p30, %p31
      %p33 = scmp.ne.s32.totalorder %s22, %s25
      %p34 = scmp.eq.s32.totalorder %s17, 1
      %p35 = por %p33, %p34
      %p36 = scmp.ne.s32.totalorder %s25, %s26
      %p37 = scmp.eq.s32.totalorder %s17, 0
      %p38 = por %p36, %p37
      %p39 = scmp.ne.s32.totalorder %s25, %s26
      %p40 = scmp.eq.s32.totalorder %s18, 1
      %p41 = por %p39, %p40
      %p43 = scmp.ne.s32.totalorder %s26, %s42
      %p44 = scmp.eq.s32.totalorder %s18, 0
      %p45 = por %p43, %p44
      %s47 = sadd.s32 %s46, 1
      %p50 = scmp.eq.s32.totalorder %s12, 1
      %p51 = scmp.ne.s32.totalorder %s46, %s48
      %p52 = scmp.eq.s32.totalorder %s12, 0
      %p53 = por %p51, %p52
      %p54 = scmp.ne.s32.totalorder %s46, %s48
      %p55 = scmp.eq.s32.totalorder %s17, 1
      %p56 = por %p54, %p55
      %p57 = scmp.ne.s32.totalorder %s48, %s49
      %p58 = scmp.eq.s32.totalorder %s17, 0
      %p59 = por %p57, %p58
      %p60 = scmp.ne.s32.totalorder %s48, %s49
      %p61 = scmp.eq.s32.totalorder %s18, 1
      %p62 = por %p60, %p61
      %p64 = scmp.ne.s32.totalorder %s49, %s63
      %p65 = scmp.eq.s32.totalorder %s18, 0
      %p66 = por %p64, %p65
      %s68 = sadd.s32 %s67, 1
      %p71 = scmp.eq.s32.totalorder %s12, 1
      %p72 = scmp.ne.s32.totalorder %s67, %s69
      %p73 = scmp.eq.s32.totalorder %s12, 0
      %p74 = por %p72, %p73
      %p75 = scmp.ne.s32.totalorder %s67, %s69
      %p76 = scmp.eq.s32.totalorder %s17, 1
      %p77 = por %p75, %p76
      %p78 = scmp.ne.s32.totalorder %s69, %s70
      %p79 = scmp.eq.s32.totalorder %s17, 0
      %p80 = por %p78, %p79
      %p81 = scmp.ne.s32.totalorder %s69, %s70
      %p82 = scmp.eq.s32.totalorder %s18, 1
      %p83 = por %p81, %p82
      %p85 = scmp.ne.s32.totalorder %s70, %s84
      %p86 = scmp.eq.s32.totalorder %s18, 0
      %p87 = por %p85, %p86
      %s89 = sadd.s32 %s88, 1
      %p92 = scmp.eq.s32.totalorder %s12, 1
      %p93 = scmp.ne.s32.totalorder %s88, %s90
      %p94 = scmp.eq.s32.totalorder %s12, 0
      %p95 = por %p93, %p94
      %p96 = scmp.ne.s32.totalorder %s88, %s90
      %p97 = scmp.eq.s32.totalorder %s17, 1
      %p98 = por %p96, %p97
      %p99 = scmp.ne.s32.totalorder %s90, %s91
      %p100 = scmp.eq.s32.totalorder %s17, 0
      %p101 = por %p99, %p100
      %p102 = scmp.ne.s32.totalorder %s90, %s91
      %p103 = scmp.eq.s32.totalorder %s18, 1
      %p104 = por %p102, %p103
      %p106 = scmp.ne.s32.totalorder %s91, %s105
      %p107 = scmp.eq.s32.totalorder %s18, 0
      %p108 = por %p106, %p107
      %s110 = sadd.s32 %s109, 1
      %p113 = scmp.eq.s32.totalorder %s12, 1
      %p114 = scmp.ne.s32.totalorder %s109, %s111
      %p115 = scmp.eq.s32.totalorder %s12, 0
      %p116 = por %p114, %p115
      %p117 = scmp.ne.s32.totalorder %s109, %s111
      %p118 = scmp.eq.s32.totalorder %s17, 1
      %p119 = por %p117, %p118
      %p120 = scmp.ne.s32.totalorder %s111, %s112
      %p121 = scmp.eq.s32.totalorder %s17, 0
      %p122 = por %p120, %p121
      %p123 = scmp.ne.s32.totalorder %s111, %s112
      %p124 = scmp.eq.s32.totalorder %s18, 1
      %p125 = por %p123, %p124
      %p127 = scmp.ne.s32.totalorder %s112, %s126
      %p128 = scmp.eq.s32.totalorder %s18, 0
      %p129 = por %p127, %p128
      %s130 = ssub.s32 %s12, %s19
      %p131 = scmp.eq.s32.totalorder %s130, 0
      %s133 = sadd.s32 %s132, 1
      %s134 = scalar_select %p131, %s132, %s133
      %p137 = pneg %p131
      %p138 = scmp.eq.s32.totalorder %s12, 1
      %p139 = por %p137, %p138
      %p140 = scmp.ne.s32.totalorder %s132, %s135
      %p141 = scmp.eq.s32.totalorder %s12, 0
      %p142 = por %p140, %p141
      %p143 = scmp.ne.s32.totalorder %s132, %s135
      %p144 = scmp.eq.s32.totalorder %s17, 1
      %p145 = por %p143, %p144
      %p146 = scmp.ne.s32.totalorder %s135, %s136
      %p147 = scmp.eq.s32.totalorder %s17, 0
      %p148 = por %p146, %p147
      %p149 = scmp.ne.s32.totalorder %s135, %s136
      %p150 = scmp.eq.s32.totalorder %s18, 1
      %p151 = por %p149, %p150
      %p153 = scmp.ne.s32.totalorder %s136, %s152
      %p154 = scmp.eq.s32.totalorder %s18, 0
      %p155 = por %p153, %p154
      %p156 = scmp.le.s32.totalorder 1, %s12
      %p157 = scmp.lt.s32.totalorder %s12, 3
      %p158 = pnand %p156, %p157
      %p159 = pneg %p158
      // Predicated region
      $region9: #{simple_nn_forward.1} parent=5 // pred_check
        _
      $region10: #{simple_nn_forward.1} parent=5 // pred_check_branch
        %161 = sbr.rel (%p158) target = $region12
      $region11: #{simple_nn_forward.1} parent=5 // pred_region
        %s162 = ssub.s32 %s12, 1
        // Predicated region
        $region13: #{simple_nn_forward.1} parent=11 // pred_check
          %p163 = pneg %p59
        $region14: #{simple_nn_forward.1} parent=11 // pred_check_branch
          %165 = sbr.rel (%p163) target = $region16
        $region15: #{simple_nn_forward.1} parent=11 // pred_region
          _
        $region16: #{simple_nn_forward.1} parent=11 // pred_fallthru
          _
        // Predicated region
        $region17: #{simple_nn_forward.1} parent=11 // pred_check
          %p166 = pneg %p80
        $region18: #{simple_nn_forward.1} parent=11 // pred_check_branch
          %168 = sbr.rel (%p166) target = $region20
        $region19: #{simple_nn_forward.1} parent=11 // pred_region
          _
        $region20: #{simple_nn_forward.1} parent=11 // pred_fallthru
          _
        // Predicated region
        $region21: #{simple_nn_forward.1} parent=11 // pred_check
          %p169 = pneg %p101
        $region22: #{simple_nn_forward.1} parent=11 // pred_check_branch
          %171 = sbr.rel (%p169) target = $region24
        $region23: #{simple_nn_forward.1} parent=11 // pred_region
          %s173 = ssub.s32 2048, 2048
          %174 = vsyncadd [#allocation3], %s173
          %s175 = sshll.u32 [#allocation2], 4
          %s176 = int_to_ptr.vmem [resolvable:$true] %s175
          %181 = dma.hbm_to_vmem [thread:$0]  %s3, 2048, %s176, [#allocation3], 64, 64, 4
        $region24: #{simple_nn_forward.1} parent=11 // pred_fallthru
          _
        // Predicated region
        $region25: #{simple_nn_forward.1} parent=11 // pred_check
          %p182 = pneg %p122
        $region26: #{simple_nn_forward.1} parent=11 // pred_check_branch
          %184 = sbr.rel (%p182) target = $region28
        $region27: #{simple_nn_forward.1} parent=11 // pred_region
          _
        $region28: #{simple_nn_forward.1} parent=11 // pred_fallthru
          _
      $region12: #{simple_nn_forward.1} parent=5 // pred_fallthru
        _
      %p185 = scmp.lt.s32.totalorder %s12, 2
      // Predicated region
      $region29: #{simple_nn_forward.1} parent=5 // pred_check
        %p186 = pneg %p185
      $region30: #{simple_nn_forward.1} parent=5 // pred_check_branch
        %188 = sbr.rel (%p186) target = $region32
      $region31: #{simple_nn_forward.1} parent=5 // pred_region
        // Predicated region
        $region33: #{simple_nn_forward.1} parent=31 // pred_check
          %p189 = pneg %p32
        $region34: #{simple_nn_forward.1} parent=31 // pred_check_branch
          %191 = sbr.rel (%p189) target = $region36
        $region35: #{simple_nn_forward.1} parent=31 // pred_region
          %p192 = scmp.lt.s32.totalorder %s12, 1
          %s193 = scalar_select %p192, %s12, 1
          %s194 = smul.addr %s193, 7
          %s195 = smul.addr %s194, 4
          %s196 = scalar_lea.vmem %s0, %s195
        $region36: #{simple_nn_forward.1} parent=31 // pred_fallthru
          _
      $region32: #{simple_nn_forward.1} parent=5 // pred_fallthru
        _
      %p197 = scmp.le.s32.totalorder 1, %s12
      %p198 = scmp.lt.s32.totalorder %s12, 3
      %p199 = pnand %p197, %p198
      %p200 = pneg %p199
      // Predicated region
      $region37: #{simple_nn_forward.1} parent=5 // pred_check
        _
      $region38: #{simple_nn_forward.1} parent=5 // pred_check_branch
        %202 = sbr.rel (%p199) target = $region40
      $region39: #{simple_nn_forward.1} parent=5 // pred_region
        %s203 = ssub.s32 %s12, 1
        // Predicated region
        $region41: #{simple_nn_forward.1} parent=39 // pred_check
          %p204 = pneg %p101
        $region42: #{simple_nn_forward.1} parent=39 // pred_check_branch
          %206 = sbr.rel (%p204) target = $region44
        $region43: #{simple_nn_forward.1} parent=39 // pred_region
          %207 = dma.done [#allocation3], 2048
        $region44: #{simple_nn_forward.1} parent=39 // pred_fallthru
          _
        %p208 = scmp.lt.s32.totalorder %s17, 1
        %s209 = scalar_select %p208, %s17, 1
        %s210 = smul.addr %s209, 7
        %s211 = smul.addr %s210, 4
        %s212 = scalar_lea.vmem %s0, %s211
        %p213 = pneg %p38
        %p214 = pneg %p35
        %p215 = pneg %p59
        %p216 = pneg %p56
        %p217 = pneg %p80
        %p218 = pneg %p77
        %p219 = pneg %p101
        %p220 = pneg %p98
        %p221 = pneg %p122
        %p222 = pneg %p119
        %p223 = pneg %p148
        %p224 = pneg %p145
        %p225 = scmp.lt.s32.totalorder %s17, 1
        %s226 = scalar_select %p225, %s17, 1
        %s227 = smul.addr %s226, 4
        %s228 = scalar_lea.vmem %s5, %s227
        %p229 = scmp.lt.s32.totalorder %s17, 1
        %s230 = scalar_select %p229, %s17, 1
        %s231 = smul.addr %s230, 7
        %s232 = smul.addr %s231, 4
        %s233 = scalar_lea.vmem %s0, %s232
        %p234 = scmp.lt.s32.totalorder %s17, 1
        %s235 = scalar_select %p234, %s17, 1
        %s236 = smul.addr %s235, 4
        %s237 = scalar_lea.vmem %s5, %s236
        %v239 = vld [vmem:[%s233] sm:$0xff]
        %v240 = vld [vmem:[%s233 + $0x8] sm:$0xff]
        %v241 = vld [vmem:[%s233 + $0x10] sm:$0xff]
        %v242 = vld [vmem:[%s233 + $0x18] sm:$0xf]
        %v243 = vld [vmem:[%s1] sm:$0xff]
        %v244 = vld [vmem:[%s1 + $0x8] sm:$0xff]
        %v245 = vld [vmem:[%s1 + $0x10] sm:$0xff]
        %v246 = vld [vmem:[%s1 + $0x18] sm:$0xff]
        %v247 = vld [vmem:[%s1 + $0x20] sm:$0xff]
        %v248 = vld [vmem:[%s1 + $0x28] sm:$0xff]
        %v249 = vld [vmem:[%s1 + $0x30] sm:$0xff]
        %v250 = vld [vmem:[%s1 + $0x38] sm:$0xff]
        %v251 = vld [vmem:[%s1 + $0x40] sm:$0xff]
        %v252 = vld [vmem:[%s1 + $0x48] sm:$0xff]
        %v253 = vld [vmem:[%s1 + $0x50] sm:$0xff]
        %v254 = vld [vmem:[%s1 + $0x58] sm:$0xff]
        %v255 = vld [vmem:[%s1 + $0x60] sm:$0xff]
        %v256 = vld [vmem:[%s1 + $0x68] sm:$0xff]
        %v257 = vld [vmem:[%s1 + $0x70] sm:$0xff]
        %v258 = vld [vmem:[%s1 + $0x78] sm:$0xff]
        %v259 = vld [vmem:[%s1 + $0x80] sm:$0xff]
        %v260 = vld [vmem:[%s1 + $0x88] sm:$0xff]
        %v261 = vld [vmem:[%s1 + $0x90] sm:$0xff]
        %v262 = vld [vmem:[%s1 + $0x98] sm:$0xff]
        %v263 = vld [vmem:[%s1 + $0xa0] sm:$0xff]
        %v264 = vld [vmem:[%s1 + $0xa8] sm:$0xff]
        %v265 = vld [vmem:[%s1 + $0xb0] sm:$0xff]
        %v266 = vld [vmem:[%s1 + $0xb8] sm:$0xff]
        %v267 = vld [vmem:[%s1 + $0xc0] sm:$0xff]
        %v268 = vld [vmem:[%s1 + $0xc8] sm:$0xff]
        %v269 = vld [vmem:[%s1 + $0xd0] sm:$0xff]
        %v270 = vld [vmem:[%s1 + $0xd8] sm:$0xff]
        %v271 = vld [vmem:[%s1 + $0xe0] sm:$0xff]
        %v272 = vld [vmem:[%s1 + $0xe8] sm:$0xff]
        %v273 = vld [vmem:[%s1 + $0xf0] sm:$0xff]
        %v274 = vld [vmem:[%s1 + $0xf8] sm:$0xff]
        %v275 = vld [vmem:[%s1 + $0x100] sm:$0xff]
        %v276 = vld [vmem:[%s1 + $0x108] sm:$0xff]
        %v277 = vld [vmem:[%s1 + $0x110] sm:$0xff]
        %v278 = vld [vmem:[%s1 + $0x118] sm:$0xff]
        %v279 = vld [vmem:[%s1 + $0x120] sm:$0xff]
        %v280 = vld [vmem:[%s1 + $0x128] sm:$0xff]
        %v281 = vld [vmem:[%s1 + $0x130] sm:$0xff]
        %v282 = vld [vmem:[%s1 + $0x138] sm:$0xff]
        %v283 = vld [vmem:[%s1 + $0x140] sm:$0xff]
        %v284 = vld [vmem:[%s1 + $0x148] sm:$0xff]
        %v285 = vld [vmem:[%s1 + $0x150] sm:$0xff]
        %v286 = vld [vmem:[%s1 + $0x158] sm:$0xff]
        %v287 = vld [vmem:[%s1 + $0x160] sm:$0xff]
        %v288 = vld [vmem:[%s1 + $0x168] sm:$0xff]
        %v289 = vld [vmem:[%s1 + $0x170] sm:$0xff]
        %v290 = vld [vmem:[%s1 + $0x178] sm:$0xff]
        %v291 = vld [vmem:[%s1 + $0x180] sm:$0xff]
        %v292 = vld [vmem:[%s1 + $0x188] sm:$0xff]
        %v293 = vld [vmem:[%s1 + $0x190] sm:$0xff]
        %v294 = vld [vmem:[%s1 + $0x198] sm:$0xff]
        %v295 = vld [vmem:[%s1 + $0x1a0] sm:$0xff]
        %v296 = vld [vmem:[%s1 + $0x1a8] sm:$0xff]
        %v297 = vld [vmem:[%s1 + $0x1b0] sm:$0xff]
        %v298 = vld [vmem:[%s1 + $0x1b8] sm:$0xff]
        %v299 = vld [vmem:[%s1 + $0x1c0] sm:$0xff]
        %v300 = vld [vmem:[%s1 + $0x1c8] sm:$0xff]
        %v301 = vld [vmem:[%s1 + $0x1d0] sm:$0xff]
        %v302 = vld [vmem:[%s1 + $0x1d8] sm:$0xff]
        %v303 = vld [vmem:[%s1 + $0x1e0] sm:$0xff]
        %v304 = vld [vmem:[%s1 + $0x1e8] sm:$0xff]
        %v305 = vld [vmem:[%s1 + $0x1f0] sm:$0xff]
        %v306 = vld [vmem:[%s1 + $0x1f8] sm:$0xff]
        %v307 = vld [vmem:[%s1 + $0x200] sm:$0xff]
        %v308 = vld [vmem:[%s1 + $0x208] sm:$0xff]
        %v309 = vld [vmem:[%s1 + $0x210] sm:$0xff]
        %v310 = vld [vmem:[%s1 + $0x218] sm:$0xff]
        %v311 = vld [vmem:[%s1 + $0x220] sm:$0xff]
        %v312 = vld [vmem:[%s1 + $0x228] sm:$0xff]
        %v313 = vld [vmem:[%s1 + $0x230] sm:$0xff]
        %v314 = vld [vmem:[%s1 + $0x238] sm:$0xff]
        %v315 = vld [vmem:[%s1 + $0x240] sm:$0xff]
        %v316 = vld [vmem:[%s1 + $0x248] sm:$0xff]
        %v317 = vld [vmem:[%s1 + $0x250] sm:$0xff]
        %v318 = vld [vmem:[%s1 + $0x258] sm:$0xff]
        %v319 = vld [vmem:[%s1 + $0x260] sm:$0xff]
        %v320 = vld [vmem:[%s1 + $0x268] sm:$0xff]
        %v321 = vld [vmem:[%s1 + $0x270] sm:$0xff]
        %v322 = vld [vmem:[%s1 + $0x278] sm:$0xff]
        %v323 = vld [vmem:[%s1 + $0x280] sm:$0xff]
        %v324 = vld [vmem:[%s1 + $0x288] sm:$0xff]
        %v325 = vld [vmem:[%s1 + $0x290] sm:$0xff]
        %v326 = vld [vmem:[%s1 + $0x298] sm:$0xff]
        %v327 = vld [vmem:[%s1 + $0x2a0] sm:$0xff]
        %v328 = vld [vmem:[%s1 + $0x2a8] sm:$0xff]
        %v329 = vld [vmem:[%s1 + $0x2b0] sm:$0xff]
        %v330 = vld [vmem:[%s1 + $0x2b8] sm:$0xff]
        %v331 = vld [vmem:[%s1 + $0x2c0] sm:$0xff]
        %v332 = vld [vmem:[%s1 + $0x2c8] sm:$0xff]
        %v333 = vld [vmem:[%s1 + $0x2d0] sm:$0xff]
        %v334 = vld [vmem:[%s1 + $0x2d8] sm:$0xff]
        %v335 = vld [vmem:[%s1 + $0x2e0] sm:$0xff]
        %v336 = vld [vmem:[%s1 + $0x2e8] sm:$0xff]
        %v337 = vld [vmem:[%s1 + $0x2f0] sm:$0xff]
        %v338 = vld [vmem:[%s1 + $0x2f8] sm:$0xff]
        %v339 = vld [vmem:[%s1 + $0x300] sm:$0xff]
        %v340 = vld [vmem:[%s1 + $0x308] sm:$0xff]
        %v341 = vld [vmem:[%s2] sm:$0x3]
        %v343 = vlaneseq
        %v344 = vshrl.u32 %v343, 7
        %v345 = vsub.s32 0, %v344
        %v346 = vrot.slane %v341, %v345
        %v347 = vlaneseq
        %v348 = vshrl.u32 %v347, 7
        %v349 = vsub.s32 1, %v348
        %v350 = vrot.slane %v341, %v349
        %v357 = vunpack.c.l.b16 %v239
        %v358 = vunpack.c.h.b16 %v239
        %v359 = vunpack.c.l.b16 %v240
        %v360 = vunpack.c.h.b16 %v240
        %v361 = vunpack.c.l.b16 %v241
        %v362 = vunpack.c.h.b16 %v241
        %v363 = vunpack.c.l.b16 %v242
        %v364 = vpack.c.b16 %v357, %v357
        %v365 = vpack.c.b16 %v358, %v358
        %v366 = vpack.c.b16 %v359, %v359
        %v367 = vpack.c.b16 %v360, %v360
        %v368 = vpack.c.b16 %v361, %v361
        %v369 = vpack.c.b16 %v362, %v362
        %v370 = vpack.c.b16 %v363, %v363
        %v475 = vunpack.c.l.b16 %v243
        %v476 = vunpack.c.h.b16 %v243
        %v477 = vunpack.c.l.b16 %v244
        %v478 = vunpack.c.h.b16 %v244
        %v479 = vunpack.c.l.b16 %v245
        %v480 = vunpack.c.h.b16 %v245
        %v481 = vunpack.c.l.b16 %v246
        %v482 = vunpack.c.h.b16 %v246
        %v483 = vunpack.c.l.b16 %v247
        %v484 = vunpack.c.h.b16 %v247
        %v485 = vunpack.c.l.b16 %v248
        %v486 = vunpack.c.h.b16 %v248
        %v487 = vunpack.c.l.b16 %v249
        %v488 = vunpack.c.h.b16 %v249
        %v489 = vunpack.c.l.b16 %v250
        %v490 = vunpack.c.h.b16 %v250
        %v491 = vunpack.c.l.b16 %v251
        %v492 = vunpack.c.h.b16 %v251
        %v493 = vunpack.c.l.b16 %v252
        %v494 = vunpack.c.h.b16 %v252
        %v495 = vunpack.c.l.b16 %v253
        %v496 = vunpack.c.h.b16 %v253
        %v497 = vunpack.c.l.b16 %v254
        %v498 = vunpack.c.h.b16 %v254
        %v499 = vunpack.c.l.b16 %v255
        %v500 = vunpack.c.h.b16 %v255
        %v501 = vunpack.c.l.b16 %v256
        %v502 = vunpack.c.h.b16 %v256
        %v503 = vunpack.c.l.b16 %v257
        %v504 = vunpack.c.h.b16 %v257
        %v505 = vunpack.c.l.b16 %v258
        %v506 = vunpack.c.h.b16 %v258
        %v507 = vunpack.c.l.b16 %v259
        %v508 = vunpack.c.h.b16 %v259
        %v509 = vunpack.c.l.b16 %v260
        %v510 = vunpack.c.h.b16 %v260
        %v511 = vunpack.c.l.b16 %v261
        %v512 = vunpack.c.h.b16 %v261
        %v513 = vunpack.c.l.b16 %v262
        %v514 = vunpack.c.h.b16 %v262
        %v515 = vunpack.c.l.b16 %v263
        %v516 = vunpack.c.h.b16 %v263
        %v517 = vunpack.c.l.b16 %v264
        %v518 = vunpack.c.h.b16 %v264
        %v519 = vunpack.c.l.b16 %v265
        %v520 = vunpack.c.h.b16 %v265
        %v521 = vunpack.c.l.b16 %v266
        %v522 = vunpack.c.h.b16 %v266
        %v523 = vunpack.c.l.b16 %v267
        %v524 = vunpack.c.h.b16 %v267
        %v525 = vunpack.c.l.b16 %v268
        %v526 = vunpack.c.h.b16 %v268
        %v527 = vunpack.c.l.b16 %v269
        %v528 = vunpack.c.h.b16 %v269
        %v529 = vunpack.c.l.b16 %v270
        %v530 = vunpack.c.h.b16 %v270
        %v531 = vunpack.c.l.b16 %v271
        %v532 = vunpack.c.h.b16 %v271
        %v533 = vunpack.c.l.b16 %v272
        %v534 = vunpack.c.h.b16 %v272
        %v535 = vunpack.c.l.b16 %v273
        %v536 = vunpack.c.h.b16 %v273
        %v537 = vunpack.c.l.b16 %v274
        %v538 = vunpack.c.h.b16 %v274
        %v539 = vunpack.c.l.b16 %v275
        %v540 = vunpack.c.h.b16 %v275
        %v541 = vunpack.c.l.b16 %v276
        %v542 = vunpack.c.h.b16 %v276
        %v543 = vunpack.c.l.b16 %v277
        %v544 = vunpack.c.h.b16 %v277
        %v545 = vunpack.c.l.b16 %v278
        %v546 = vunpack.c.h.b16 %v278
        %v547 = vunpack.c.l.b16 %v279
        %v548 = vunpack.c.h.b16 %v279
        %v549 = vunpack.c.l.b16 %v280
        %v550 = vunpack.c.h.b16 %v280
        %v551 = vunpack.c.l.b16 %v281
        %v552 = vunpack.c.h.b16 %v281
        %v553 = vunpack.c.l.b16 %v282
        %v554 = vunpack.c.h.b16 %v282
        %v555 = vunpack.c.l.b16 %v283
        %v556 = vunpack.c.h.b16 %v283
        %v557 = vunpack.c.l.b16 %v284
        %v558 = vunpack.c.h.b16 %v284
        %v559 = vunpack.c.l.b16 %v285
        %v560 = vunpack.c.h.b16 %v285
        %v561 = vunpack.c.l.b16 %v286
        %v562 = vunpack.c.h.b16 %v286
        %v563 = vunpack.c.l.b16 %v287
        %v564 = vunpack.c.h.b16 %v287
        %v565 = vunpack.c.l.b16 %v288
        %v566 = vunpack.c.h.b16 %v288
        %v567 = vunpack.c.l.b16 %v289
        %v568 = vunpack.c.h.b16 %v289
        %v569 = vunpack.c.l.b16 %v290
        %v570 = vunpack.c.h.b16 %v290
        %v571 = vunpack.c.l.b16 %v291
        %v572 = vunpack.c.h.b16 %v291
        %v573 = vunpack.c.l.b16 %v292
        %v574 = vunpack.c.h.b16 %v292
        %v575 = vunpack.c.l.b16 %v293
        %v576 = vunpack.c.h.b16 %v293
        %v577 = vunpack.c.l.b16 %v294
        %v578 = vunpack.c.h.b16 %v294
        %v579 = vunpack.c.l.b16 %v295
        %v580 = vunpack.c.h.b16 %v295
        %v581 = vunpack.c.l.b16 %v296
        %v582 = vunpack.c.h.b16 %v296
        %v583 = vunpack.c.l.b16 %v297
        %v584 = vunpack.c.h.b16 %v297
        %v585 = vunpack.c.l.b16 %v298
        %v586 = vunpack.c.h.b16 %v298
        %v587 = vunpack.c.l.b16 %v299
        %v588 = vunpack.c.h.b16 %v299
        %v589 = vunpack.c.l.b16 %v300
        %v590 = vunpack.c.h.b16 %v300
        %v591 = vunpack.c.l.b16 %v301
        %v592 = vunpack.c.h.b16 %v301
        %v593 = vunpack.c.l.b16 %v302
        %v594 = vunpack.c.h.b16 %v302
        %v595 = vunpack.c.l.b16 %v303
        %v596 = vunpack.c.h.b16 %v303
        %v597 = vunpack.c.l.b16 %v304
        %v598 = vunpack.c.h.b16 %v304
        %v599 = vunpack.c.l.b16 %v305
        %v600 = vunpack.c.h.b16 %v305
        %v601 = vunpack.c.l.b16 %v306
        %v602 = vunpack.c.h.b16 %v306
        %v603 = vunpack.c.l.b16 %v307
        %v604 = vunpack.c.h.b16 %v307
        %v605 = vunpack.c.l.b16 %v308
        %v606 = vunpack.c.h.b16 %v308
        %v607 = vunpack.c.l.b16 %v309
        %v608 = vunpack.c.h.b16 %v309
        %v609 = vunpack.c.l.b16 %v310
        %v610 = vunpack.c.h.b16 %v310
        %v611 = vunpack.c.l.b16 %v311
        %v612 = vunpack.c.h.b16 %v311
        %v613 = vunpack.c.l.b16 %v312
        %v614 = vunpack.c.h.b16 %v312
        %v615 = vunpack.c.l.b16 %v313
        %v616 = vunpack.c.h.b16 %v313
        %v617 = vunpack.c.l.b16 %v314
        %v618 = vunpack.c.h.b16 %v314
        %v619 = vunpack.c.l.b16 %v315
        %v620 = vunpack.c.h.b16 %v315
        %v621 = vunpack.c.l.b16 %v316
        %v622 = vunpack.c.h.b16 %v316
        %v623 = vunpack.c.l.b16 %v317
        %v624 = vunpack.c.h.b16 %v317
        %v625 = vunpack.c.l.b16 %v318
        %v626 = vunpack.c.h.b16 %v318
        %v627 = vunpack.c.l.b16 %v319
        %v628 = vunpack.c.h.b16 %v319
        %v629 = vunpack.c.l.b16 %v320
        %v630 = vunpack.c.h.b16 %v320
        %v631 = vunpack.c.l.b16 %v321
        %v632 = vunpack.c.h.b16 %v321
        %v633 = vunpack.c.l.b16 %v322
        %v634 = vunpack.c.h.b16 %v322
        %v635 = vunpack.c.l.b16 %v323
        %v636 = vunpack.c.h.b16 %v323
        %v637 = vunpack.c.l.b16 %v324
        %v638 = vunpack.c.h.b16 %v324
        %v639 = vunpack.c.l.b16 %v325
        %v640 = vunpack.c.h.b16 %v325
        %v641 = vunpack.c.l.b16 %v326
        %v642 = vunpack.c.h.b16 %v326
        %v643 = vunpack.c.l.b16 %v327
        %v644 = vunpack.c.h.b16 %v327
        %v645 = vunpack.c.l.b16 %v328
        %v646 = vunpack.c.h.b16 %v328
        %v647 = vunpack.c.l.b16 %v329
        %v648 = vunpack.c.h.b16 %v329
        %v649 = vunpack.c.l.b16 %v330
        %v650 = vunpack.c.h.b16 %v330
        %v651 = vunpack.c.l.b16 %v331
        %v652 = vunpack.c.h.b16 %v331
        %v653 = vunpack.c.l.b16 %v332
        %v654 = vunpack.c.h.b16 %v332
        %v655 = vunpack.c.l.b16 %v333
        %v656 = vunpack.c.h.b16 %v333
        %v657 = vunpack.c.l.b16 %v334
        %v658 = vunpack.c.h.b16 %v334
        %v659 = vunpack.c.l.b16 %v335
        %v660 = vunpack.c.h.b16 %v335
        %v661 = vunpack.c.l.b16 %v336
        %v662 = vunpack.c.h.b16 %v336
        %v663 = vunpack.c.l.b16 %v337
        %v664 = vunpack.c.h.b16 %v337
        %v665 = vunpack.c.l.b16 %v338
        %v666 = vunpack.c.h.b16 %v338
        %v667 = vunpack.c.l.b16 %v339
        %v668 = vunpack.c.h.b16 %v339
        %v669 = vunpack.c.l.b16 %v340
        %v670 = vunpack.c.h.b16 %v340
        %v671 = vpack.c.b16 %v477, %v475
        %v672 = vpack.c.b16 %v478, %v476
        %v673 = vpack.c.b16 %v481, %v479
        %v674 = vpack.c.b16 %v482, %v480
        %v675 = vpack.c.b16 %v485, %v483
        %v676 = vpack.c.b16 %v486, %v484
        %v677 = vpack.c.b16 %v489, %v487
        %v678 = vpack.c.b16 %v490, %v488
        %v679 = vpack.c.b16 %v493, %v491
        %v680 = vpack.c.b16 %v494, %v492
        %v681 = vpack.c.b16 %v497, %v495
        %v682 = vpack.c.b16 %v498, %v496
        %v683 = vpack.c.b16 %v501, %v499
        %v684 = vpack.c.b16 %v502, %v500
        %v685 = vpack.c.b16 %v505, %v503
        %v686 = vpack.c.b16 %v506, %v504
        %v687 = vpack.c.b16 %v509, %v507
        %v688 = vpack.c.b16 %v510, %v508
        %v689 = vpack.c.b16 %v513, %v511
        %v690 = vpack.c.b16 %v514, %v512
        %v691 = vpack.c.b16 %v517, %v515
        %v692 = vpack.c.b16 %v518, %v516
        %v693 = vpack.c.b16 %v521, %v519
        %v694 = vpack.c.b16 %v522, %v520
        %v695 = vpack.c.b16 %v525, %v523
        %v696 = vpack.c.b16 %v526, %v524
        %v697 = vpack.c.b16 %v529, %v527
        %v698 = vpack.c.b16 %v530, %v528
        %v699 = vpack.c.b16 %v533, %v531
        %v700 = vpack.c.b16 %v534, %v532
        %v701 = vpack.c.b16 %v537, %v535
        %v702 = vpack.c.b16 %v538, %v536
        %v703 = vpack.c.b16 %v541, %v539
        %v704 = vpack.c.b16 %v542, %v540
        %v705 = vpack.c.b16 %v545, %v543
        %v706 = vpack.c.b16 %v546, %v544
        %v707 = vpack.c.b16 %v549, %v547
        %v708 = vpack.c.b16 %v550, %v548
        %v709 = vpack.c.b16 %v553, %v551
        %v710 = vpack.c.b16 %v554, %v552
        %v711 = vpack.c.b16 %v557, %v555
        %v712 = vpack.c.b16 %v558, %v556
        %v713 = vpack.c.b16 %v561, %v559
        %v714 = vpack.c.b16 %v562, %v560
        %v715 = vpack.c.b16 %v565, %v563
        %v716 = vpack.c.b16 %v566, %v564
        %v717 = vpack.c.b16 %v569, %v567
        %v718 = vpack.c.b16 %v570, %v568
        %v719 = vpack.c.b16 %v573, %v571
        %v720 = vpack.c.b16 %v574, %v572
        %v721 = vpack.c.b16 %v577, %v575
        %v722 = vpack.c.b16 %v578, %v576
        %v723 = vpack.c.b16 %v581, %v579
        %v724 = vpack.c.b16 %v582, %v580
        %v725 = vpack.c.b16 %v585, %v583
        %v726 = vpack.c.b16 %v586, %v584
        %v727 = vpack.c.b16 %v589, %v587
        %v728 = vpack.c.b16 %v590, %v588
        %v729 = vpack.c.b16 %v593, %v591
        %v730 = vpack.c.b16 %v594, %v592
        %v731 = vpack.c.b16 %v597, %v595
        %v732 = vpack.c.b16 %v598, %v596
        %v733 = vpack.c.b16 %v601, %v599
        %v734 = vpack.c.b16 %v602, %v600
        %v735 = vpack.c.b16 %v605, %v603
        %v736 = vpack.c.b16 %v606, %v604
        %v737 = vpack.c.b16 %v609, %v607
        %v738 = vpack.c.b16 %v610, %v608
        %v739 = vpack.c.b16 %v613, %v611
        %v740 = vpack.c.b16 %v614, %v612
        %v741 = vpack.c.b16 %v617, %v615
        %v742 = vpack.c.b16 %v618, %v616
        %v743 = vpack.c.b16 %v621, %v619
        %v744 = vpack.c.b16 %v622, %v620
        %v745 = vpack.c.b16 %v625, %v623
        %v746 = vpack.c.b16 %v626, %v624
        %v747 = vpack.c.b16 %v629, %v627
        %v748 = vpack.c.b16 %v630, %v628
        %v749 = vpack.c.b16 %v633, %v631
        %v750 = vpack.c.b16 %v634, %v632
        %v751 = vpack.c.b16 %v637, %v635
        %v752 = vpack.c.b16 %v638, %v636
        %v753 = vpack.c.b16 %v641, %v639
        %v754 = vpack.c.b16 %v642, %v640
        %v755 = vpack.c.b16 %v645, %v643
        %v756 = vpack.c.b16 %v646, %v644
        %v757 = vpack.c.b16 %v649, %v647
        %v758 = vpack.c.b16 %v650, %v648
        %v759 = vpack.c.b16 %v653, %v651
        %v760 = vpack.c.b16 %v654, %v652
        %v761 = vpack.c.b16 %v657, %v655
        %v762 = vpack.c.b16 %v658, %v656
        %v763 = vpack.c.b16 %v661, %v659
        %v764 = vpack.c.b16 %v662, %v660
        %v765 = vpack.c.b16 %v665, %v663
        %v766 = vpack.c.b16 %v666, %v664
        %v767 = vpack.c.b16 %v669, %v667
        %v768 = vpack.c.b16 %v670, %v668
        %vm867 = vcmask 130048
        %v869 = vsel %vm867, %v370, 0
        %871 = vmatprep.subr.bf16.mxu0 %v672
        %872 = vmatpush1.bf16.msra.mxu0 %v671
        %873 = vmatprep.subr.bf16.mxu0 %v674
        %874 = vmatpush1.bf16.msra.mxu0 %v673
        %875 = vmatprep.subr.bf16.mxu0 %v676
        %876 = vmatpush1.bf16.msra.mxu0 %v675
        %877 = vmatprep.subr.bf16.mxu0 %v678
        %878 = vmatpush1.bf16.msra.mxu0 %v677
        %879 = vmatprep.subr.bf16.mxu0 %v680
        %880 = vmatpush1.bf16.msra.mxu0 %v679
        %881 = vmatprep.subr.bf16.mxu0 %v682
        %882 = vmatpush1.bf16.msra.mxu0 %v681
        %883 = vmatprep.subr.bf16.mxu0 %v684
        %884 = vmatpush1.bf16.msra.mxu0 %v683
        %885 = vmatprep.subr.bf16.mxu0 %v686
        %886 = vmatpush1.bf16.msra.mxu0 %v685
        %887 = vmatprep.subr.bf16.mxu0 %v688
        %888 = vmatpush1.bf16.msra.mxu0 %v687
        %889 = vmatprep.subr.bf16.mxu0 %v690
        %890 = vmatpush1.bf16.msra.mxu0 %v689
        %891 = vmatprep.subr.bf16.mxu0 %v692
        %892 = vmatpush1.bf16.msra.mxu0 %v691
        %893 = vmatprep.subr.bf16.mxu0 %v694
        %894 = vmatpush1.bf16.msra.mxu0 %v693
        %895 = vmatprep.subr.bf16.mxu0 %v696
        %896 = vmatpush1.bf16.msra.mxu0 %v695
        %897 = vmatprep.subr.bf16.mxu0 %v698
        %898 = vmatpush1.bf16.msra.mxu0 %v697
        %899 = vmatprep.subr.bf16.mxu0 %v700
        %900 = vmatpush1.bf16.msra.mxu0 %v699
        %901 = vmatprep.subr.bf16.mxu0 %v702
        %902 = vmatpush1.bf16.msra.mxu0 %v701
        %903 = vmatprep.mubr.bf16.mxu0 %v365
        %904 = vmatmul.mubr.bf16.gmra.mrb[0].mxu0 %v364
        %v905 = vpop.f32.mrb[0].mxu0
        %v906 = vadd.f32 %v346, %v905
        %v907 = vpop.f32.mrb[0].mxu0
        %v908 = vadd.f32 %v350, %v907
        %v909 = vpop.f32.mrb[0].mxu0
        %v910 = vpop.f32.mrb[0].mxu0
        %911 = vdwg.mxu0
        %912 = vmatprep.subr.bf16.mxu0 %v704
        %913 = vmatpush1.bf16.msra.mxu0 %v703
        %914 = vmatprep.subr.bf16.mxu0 %v706
        %915 = vmatpush1.bf16.msra.mxu0 %v705
        %916 = vmatprep.subr.bf16.mxu0 %v708
        %917 = vmatpush1.bf16.msra.mxu0 %v707
        %918 = vmatprep.subr.bf16.mxu0 %v710
        %919 = vmatpush1.bf16.msra.mxu0 %v709
        %920 = vmatprep.subr.bf16.mxu0 %v712
        %921 = vmatpush1.bf16.msra.mxu0 %v711
        %922 = vmatprep.subr.bf16.mxu0 %v714
        %923 = vmatpush1.bf16.msra.mxu0 %v713
        %924 = vmatprep.subr.bf16.mxu0 %v716
        %925 = vmatpush1.bf16.msra.mxu0 %v715
        %926 = vmatprep.subr.bf16.mxu0 %v718
        %927 = vmatpush1.bf16.msra.mxu0 %v717
        %928 = vmatprep.subr.bf16.mxu0 %v720
        %929 = vmatpush1.bf16.msra.mxu0 %v719
        %930 = vmatprep.subr.bf16.mxu0 %v722
        %931 = vmatpush1.bf16.msra.mxu0 %v721
        %932 = vmatprep.subr.bf16.mxu0 %v724
        %933 = vmatpush1.bf16.msra.mxu0 %v723
        %934 = vmatprep.subr.bf16.mxu0 %v726
        %935 = vmatpush1.bf16.msra.mxu0 %v725
        %936 = vmatprep.subr.bf16.mxu0 %v728
        %937 = vmatpush1.bf16.msra.mxu0 %v727
        %938 = vmatprep.subr.bf16.mxu0 %v730
        %939 = vmatpush1.bf16.msra.mxu0 %v729
        %940 = vmatprep.subr.bf16.mxu0 %v732
        %941 = vmatpush1.bf16.msra.mxu0 %v731
        %942 = vmatprep.subr.bf16.mxu0 %v734
        %943 = vmatpush1.bf16.msra.mxu0 %v733
        %944 = vmatprep.mubr.bf16.mxu0 %v367
        %945 = vmatmul.mubr.bf16.gmra.mrb[0].mxu0 %v366
        %v946 = vpop.f32.mrb[0].mxu0
        %v947 = vadd.f32 %v906, %v946
        %v948 = vpop.f32.mrb[0].mxu0
        %v949 = vadd.f32 %v908, %v948
        %v950 = vpop.f32.mrb[0].mxu0
        %v951 = vpop.f32.mrb[0].mxu0
        %952 = vdwg.mxu0
        %953 = vmatprep.subr.bf16.mxu0 %v736
        %954 = vmatpush1.bf16.msra.mxu0 %v735
        %955 = vmatprep.subr.bf16.mxu0 %v738
        %956 = vmatpush1.bf16.msra.mxu0 %v737
        %957 = vmatprep.subr.bf16.mxu0 %v740
        %958 = vmatpush1.bf16.msra.mxu0 %v739
        %959 = vmatprep.subr.bf16.mxu0 %v742
        %960 = vmatpush1.bf16.msra.mxu0 %v741
        %961 = vmatprep.subr.bf16.mxu0 %v744
        %962 = vmatpush1.bf16.msra.mxu0 %v743
        %963 = vmatprep.subr.bf16.mxu0 %v746
        %964 = vmatpush1.bf16.msra.mxu0 %v745
        %965 = vmatprep.subr.bf16.mxu0 %v748
        %966 = vmatpush1.bf16.msra.mxu0 %v747
        %967 = vmatprep.subr.bf16.mxu0 %v750
        %968 = vmatpush1.bf16.msra.mxu0 %v749
        %969 = vmatprep.subr.bf16.mxu0 %v752
        %970 = vmatpush1.bf16.msra.mxu0 %v751
        %971 = vmatprep.subr.bf16.mxu0 %v754
        %972 = vmatpush1.bf16.msra.mxu0 %v753
        %973 = vmatprep.subr.bf16.mxu0 %v756
        %974 = vmatpush1.bf16.msra.mxu0 %v755
        %975 = vmatprep.subr.bf16.mxu0 %v758
        %976 = vmatpush1.bf16.msra.mxu0 %v757
        %977 = vmatprep.subr.bf16.mxu0 %v760
        %978 = vmatpush1.bf16.msra.mxu0 %v759
        %979 = vmatprep.subr.bf16.mxu0 %v762
        %980 = vmatpush1.bf16.msra.mxu0 %v761
        %981 = vmatprep.subr.bf16.mxu0 %v764
        %982 = vmatpush1.bf16.msra.mxu0 %v763
        %983 = vmatprep.subr.bf16.mxu0 %v766
        %984 = vmatpush1.bf16.msra.mxu0 %v765
        %985 = vmatprep.mubr.bf16.mxu0 %v369
        %986 = vmatmul.mubr.bf16.gmra.mrb[0].mxu0 %v368
        %v987 = vpop.f32.mrb[0].mxu0
        %v988 = vadd.f32 %v947, %v987
        %v989 = vpop.f32.mrb[0].mxu0
        %v990 = vadd.f32 %v949, %v989
        %v991 = vpop.f32.mrb[0].mxu0
        %v992 = vpop.f32.mrb[0].mxu0
        %993 = vdwg.mxu0
        %994 = vmatprep.subr.bf16.mxu0 %v768
        %995 = vmatpush1.bf16.msra.mxu0 %v767
        %996 = vmatprep.subr.bf16.mxu0 0
        %997 = vmatpush1.bf16.msra.mxu0 0
        %998 = vmatprep.subr.bf16.mxu0 0
        %999 = vmatpush1.bf16.msra.mxu0 0
        %1000 = vmatprep.subr.bf16.mxu0 0
        %1001 = vmatpush1.bf16.msra.mxu0 0
        %1002 = vmatprep.subr.bf16.mxu0 0
        %1003 = vmatpush1.bf16.msra.mxu0 0
        %1004 = vmatprep.subr.bf16.mxu0 0
        %1005 = vmatpush1.bf16.msra.mxu0 0
        %1006 = vmatprep.subr.bf16.mxu0 0
        %1007 = vmatpush1.bf16.msra.mxu0 0
        %1008 = vmatprep.subr.bf16.mxu0 0
        %1009 = vmatpush1.bf16.msra.mxu0 0
        %1010 = vmatprep.subr.bf16.mxu0 0
        %1011 = vmatpush1.bf16.msra.mxu0 0
        %1012 = vmatprep.subr.bf16.mxu0 0
        %1013 = vmatpush1.bf16.msra.mxu0 0
        %1014 = vmatprep.subr.bf16.mxu0 0
        %1015 = vmatpush1.bf16.msra.mxu0 0
        %1016 = vmatprep.subr.bf16.mxu0 0
        %1017 = vmatpush1.bf16.msra.mxu0 0
        %1018 = vmatprep.subr.bf16.mxu0 0
        %1019 = vmatpush1.bf16.msra.mxu0 0
        %1020 = vmatprep.subr.bf16.mxu0 0
        %1021 = vmatpush1.bf16.msra.mxu0 0
        %1022 = vmatprep.subr.bf16.mxu0 0
        %1023 = vmatpush1.bf16.msra.mxu0 0
        %1024 = vmatprep.subr.bf16.mxu0 0
        %1025 = vmatpush1.bf16.msra.mxu0 0
        %1026 = vmatprep.mubr.bf16.mxu0 0
        %1027 = vmatmul.mubr.bf16.gmra.mrb[0].mxu0 %v869
        %v1028 = vpop.f32.mrb[0].mxu0
        %v1029 = vadd.f32 %v988, %v1028
        %v1030 = vpop.f32.mrb[0].mxu0
        %v1031 = vadd.f32 %v990, %v1030
        %v1032 = vpop.f32.mrb[0].mxu0
        %v1033 = vpop.f32.mrb[0].mxu0
        %1034 = vdwg.mxu0
        %v1035 = vmax.f32 %v1029, 0.0
        %v1036 = vmax.f32 %v1031, 0.0
        %v1037 = vpack.c.bf16 %v1035, %v1035
        %v1038 = vpack.c.bf16 %v1036, %v1036
        %v1039 = vld [vmem:[#allocation2] sm:$0xf]
        %v1040 = vld [vmem:[#allocation2 + $0x4] sm:$0xf]
        %v1041 = vld [vmem:[#allocation2 + $0x8] sm:$0xf]
        %v1042 = vld [vmem:[#allocation2 + $0xc] sm:$0xf]
        %v1043 = vld [vmem:[#allocation2 + $0x10] sm:$0xf]
        %v1044 = vld [vmem:[#allocation2 + $0x14] sm:$0xf]
        %v1045 = vld [vmem:[#allocation2 + $0x18] sm:$0xf]
        %v1046 = vld [vmem:[#allocation2 + $0x1c] sm:$0xf]
        %v1047 = vld [vmem:[#allocation2 + $0x20] sm:$0xf]
        %v1048 = vld [vmem:[#allocation2 + $0x24] sm:$0xf]
        %v1049 = vld [vmem:[#allocation2 + $0x28] sm:$0xf]
        %v1050 = vld [vmem:[#allocation2 + $0x2c] sm:$0xf]
        %v1051 = vld [vmem:[#allocation2 + $0x30] sm:$0xf]
        %v1052 = vld [vmem:[#allocation2 + $0x34] sm:$0xf]
        %v1053 = vld [vmem:[#allocation2 + $0x38] sm:$0xf]
        %v1054 = vld [vmem:[#allocation2 + $0x3c] sm:$0xf]
        %v1055 = vld [vmem:[#allocation2 + $0x40] sm:$0xf]
        %v1056 = vld [vmem:[#allocation2 + $0x44] sm:$0xf]
        %v1057 = vld [vmem:[#allocation2 + $0x48] sm:$0xf]
        %v1058 = vld [vmem:[#allocation2 + $0x4c] sm:$0xf]
        %v1059 = vld [vmem:[#allocation2 + $0x50] sm:$0xf]
        %v1060 = vld [vmem:[#allocation2 + $0x54] sm:$0xf]
        %v1061 = vld [vmem:[#allocation2 + $0x58] sm:$0xf]
        %v1062 = vld [vmem:[#allocation2 + $0x5c] sm:$0xf]
        %v1063 = vld [vmem:[#allocation2 + $0x60] sm:$0xf]
        %v1064 = vld [vmem:[#allocation2 + $0x64] sm:$0xf]
        %v1065 = vld [vmem:[#allocation2 + $0x68] sm:$0xf]
        %v1066 = vld [vmem:[#allocation2 + $0x6c] sm:$0xf]
        %v1067 = vld [vmem:[#allocation2 + $0x70] sm:$0xf]
        %v1068 = vld [vmem:[#allocation2 + $0x74] sm:$0xf]
        %v1069 = vld [vmem:[#allocation2 + $0x78] sm:$0xf]
        %v1070 = vld [vmem:[#allocation2 + $0x7c] sm:$0xf]
        %v1071 = vld [vmem:[%s4] sm:$0x1]
        %v1073 = vlaneseq
        %v1074 = vshrl.u32 %v1073, 7
        %v1075 = vsub.s32 0, %v1074
        %v1076 = vrot.slane %v1071, %v1075
        %v1110 = vunpack.c.l.b16 %v1039
        %v1111 = vunpack.c.l.b16 %v1040
        %v1112 = vunpack.c.l.b16 %v1041
        %v1113 = vunpack.c.l.b16 %v1042
        %v1114 = vunpack.c.l.b16 %v1043
        %v1115 = vunpack.c.l.b16 %v1044
        %v1116 = vunpack.c.l.b16 %v1045
        %v1117 = vunpack.c.l.b16 %v1046
        %v1118 = vunpack.c.l.b16 %v1047
        %v1119 = vunpack.c.l.b16 %v1048
        %v1120 = vunpack.c.l.b16 %v1049
        %v1121 = vunpack.c.l.b16 %v1050
        %v1122 = vunpack.c.l.b16 %v1051
        %v1123 = vunpack.c.l.b16 %v1052
        %v1124 = vunpack.c.l.b16 %v1053
        %v1125 = vunpack.c.l.b16 %v1054
        %v1126 = vunpack.c.l.b16 %v1055
        %v1127 = vunpack.c.l.b16 %v1056
        %v1128 = vunpack.c.l.b16 %v1057
        %v1129 = vunpack.c.l.b16 %v1058
        %v1130 = vunpack.c.l.b16 %v1059
        %v1131 = vunpack.c.l.b16 %v1060
        %v1132 = vunpack.c.l.b16 %v1061
        %v1133 = vunpack.c.l.b16 %v1062
        %v1134 = vunpack.c.l.b16 %v1063
        %v1135 = vunpack.c.l.b16 %v1064
        %v1136 = vunpack.c.l.b16 %v1065
        %v1137 = vunpack.c.l.b16 %v1066
        %v1138 = vunpack.c.l.b16 %v1067
        %v1139 = vunpack.c.l.b16 %v1068
        %v1140 = vunpack.c.l.b16 %v1069
        %v1141 = vunpack.c.l.b16 %v1070
        %v1142 = vpack.c.b16 %v1111, %v1110
        %v1143 = vpack.c.b16 %v1113, %v1112
        %v1144 = vpack.c.b16 %v1115, %v1114
        %v1145 = vpack.c.b16 %v1117, %v1116
        %v1146 = vpack.c.b16 %v1119, %v1118
        %v1147 = vpack.c.b16 %v1121, %v1120
        %v1148 = vpack.c.b16 %v1123, %v1122
        %v1149 = vpack.c.b16 %v1125, %v1124
        %v1150 = vpack.c.b16 %v1127, %v1126
        %v1151 = vpack.c.b16 %v1129, %v1128
        %v1152 = vpack.c.b16 %v1131, %v1130
        %v1153 = vpack.c.b16 %v1133, %v1132
        %v1154 = vpack.c.b16 %v1135, %v1134
        %v1155 = vpack.c.b16 %v1137, %v1136
        %v1156 = vpack.c.b16 %v1139, %v1138
        %v1157 = vpack.c.b16 %v1141, %v1140
        %1174 = vmatprep.subr.bf16.mxu0 0
        %1175 = vmatpush1.bf16.msra.mxu0 %v1142
        %1176 = vmatprep.subr.bf16.mxu0 0
        %1177 = vmatpush1.bf16.msra.mxu0 %v1143
        %1178 = vmatprep.subr.bf16.mxu0 0
        %1179 = vmatpush1.bf16.msra.mxu0 %v1144
        %1180 = vmatprep.subr.bf16.mxu0 0
        %1181 = vmatpush1.bf16.msra.mxu0 %v1145
        %1182 = vmatprep.subr.bf16.mxu0 0
        %1183 = vmatpush1.bf16.msra.mxu0 %v1146
        %1184 = vmatprep.subr.bf16.mxu0 0
        %1185 = vmatpush1.bf16.msra.mxu0 %v1147
        %1186 = vmatprep.subr.bf16.mxu0 0
        %1187 = vmatpush1.bf16.msra.mxu0 %v1148
        %1188 = vmatprep.subr.bf16.mxu0 0
        %1189 = vmatpush1.bf16.msra.mxu0 %v1149
        %1190 = vmatprep.subr.bf16.mxu0 0
        %1191 = vmatpush1.bf16.msra.mxu0 %v1150
        %1192 = vmatprep.subr.bf16.mxu0 0
        %1193 = vmatpush1.bf16.msra.mxu0 %v1151
        %1194 = vmatprep.subr.bf16.mxu0 0
        %1195 = vmatpush1.bf16.msra.mxu0 %v1152
        %1196 = vmatprep.subr.bf16.mxu0 0
        %1197 = vmatpush1.bf16.msra.mxu0 %v1153
        %1198 = vmatprep.subr.bf16.mxu0 0
        %1199 = vmatpush1.bf16.msra.mxu0 %v1154
        %1200 = vmatprep.subr.bf16.mxu0 0
        %1201 = vmatpush1.bf16.msra.mxu0 %v1155
        %1202 = vmatprep.subr.bf16.mxu0 0
        %1203 = vmatpush1.bf16.msra.mxu0 %v1156
        %1204 = vmatprep.subr.bf16.mxu0 0
        %1205 = vmatpush1.bf16.msra.mxu0 %v1157
        %1206 = vmatprep.mubr.bf16.mxu0 %v1038
        %1207 = vmatmul.mubr.bf16.gmra.mrb[0].mxu0 %v1037
        %v1208 = vpop.f32.mrb[0].mxu0
        %v1209 = vadd.f32 %v1076, %v1208
        %v1210 = vpop.f32.mrb[0].mxu0
        %v1211 = vpop.f32.mrb[0].mxu0
        %v1212 = vpop.f32.mrb[0].mxu0
        %1213 = vdwg.mxu0
        %v1214 = vpack.c.bf16 %v1209, %v1209
        %1215 = vst [vmem:[%s237] sm:$0xf] %v1214
        %p1216 = scmp.lt.s32.totalorder %s17, 1
        %s1217 = scalar_select %p1216, %s17, 1
        %s1218 = smul.addr %s1217, 4
        %s1219 = scalar_lea.vmem %s5, %s1218
        // Predicated region
        $region45: #{simple_nn_forward.1} parent=39 // pred_check
          %p1220 = pneg %p145
        $region46: #{simple_nn_forward.1} parent=39 // pred_check_branch
          %1222 = sbr.rel (%p1220) target = $region48
        $region47: #{simple_nn_forward.1} parent=39 // pred_region
          _
        $region48: #{simple_nn_forward.1} parent=39 // pred_fallthru
          _
      $region40: #{simple_nn_forward.1} parent=5 // pred_fallthru
        _
      %p1223 = scmp.le.s32.totalorder 2, %s12
      // Predicated region
      $region49: #{simple_nn_forward.1} parent=5 // pred_check
        %p1224 = pneg %p1223
      $region50: #{simple_nn_forward.1} parent=5 // pred_check_branch
        %1226 = sbr.rel (%p1224) target = $region52
      $region51: #{simple_nn_forward.1} parent=5 // pred_region
        %s1227 = ssub.s32 %s12, 2
        // Predicated region
        $region53: #{simple_nn_forward.1} parent=51 // pred_check
          %p1228 = pneg %p151
        $region54: #{simple_nn_forward.1} parent=51 // pred_check_branch
          %1230 = sbr.rel (%p1228) target = $region56
        $region55: #{simple_nn_forward.1} parent=51 // pred_region
          %p1231 = scmp.lt.s32.totalorder %s18, 1
          %s1232 = scalar_select %p1231, %s18, 1
          %s1233 = smul.addr %s1232, 4
          %s1234 = scalar_lea.vmem %s5, %s1233
        $region56: #{simple_nn_forward.1} parent=51 // pred_fallthru
          _
      $region52: #{simple_nn_forward.1} parent=5 // pred_fallthru
        _
    $region6: #{simple_nn_forward.1} parent=1 // loop_footer
      %s16 = sadd.s32 1, %s12
    $region7: #{simple_nn_forward.1} parent=1 // loop_footer_branch
      %11 = sbr.rel target = $region3
    $region8: #{simple_nn_forward.1} parent=1 // loop_exit
      _
    %1235 = vsyncpa [#allocation3], 1
    %s1236 = scalar_lea.sflag [#allocation3], 1
    %1237 = vsyncpa %s1236, 1

</llo_original>
